<compile_context>
chip_gen: v7x
topology: tpu7x:2x2x1
jax: 0.10.0
libtpu: 0.0.40
codegen_flags: <defaults>
</compile_context>

<pallas_src>
import jax
import jax.numpy as jnp
from jax.experimental import pallas as pl
from jax.experimental.pallas import tpu as pltpu

LANES = 128
SUBLANES = 8  # f32 sublanes per vreg


def _round_up(x, m):
    return ((x + m - 1) // m) * m


def _dense_nn_kernel(x_ref, w_ref, o_ref):
    """x_ref: (TB, S) activation slab, w_ref: (L, S, S) packed weights
    (bias folded into the 'ones' row), o_ref: (TB, S).

    slab starts as [x | zeros | 1]; each layer adds its matmul result into its
    own zero column range, reproducing the dense-concat semantics.
    """
    slab = x_ref[...]
    n_layers = w_ref.shape[0]
    for l in range(n_layers):  # static, fully unrolled (3 layers)
        slab = slab + jnp.dot(slab, w_ref[l], preferred_element_type=jnp.float32)
    o_ref[...] = slab  # single full-width unmasked lane-dense store


def init_dense_nn_params(hn_list, key):
    """Deterministic init matching nn.Linear(dim_sum + in_num, out_num).

    Returns list of (W, b) with W shaped (in_features, out_features)
    (transpose of PyTorch's (out, in) layout) and b shaped (out_features,).
    """
    params = []
    dim_sum = 0
    for in_num, out_num in zip(hn_list[:-1], hn_list[1:]):
        in_features = dim_sum + in_num
        key, kw, kb = jax.random.split(key, 3)
        bound = 1.0 / (in_features ** 0.5)  # PyTorch default uniform bound
        W = jax.random.uniform(
            kw, (in_features, out_num), jnp.float32, minval=-bound, maxval=bound
        )
        b = jax.random.uniform(
            kb, (out_num,), jnp.float32, minval=-bound, maxval=bound
        )
        params.append((W, b))
        dim_sum += in_num
    return params


def _pack_params(params, slab_w, ones_col):
    """Zero-pack each (in_f, out_f) weight into a (slab_w, slab_w) matrix whose
    output columns land at that layer's slab offset (== its in_features, since
    in_features is the cumulative width of everything before it).  The bias is
    folded into row `ones_col` so the kernel needs no separate bias operand."""
    n_layers = len(params)
    Wp = jnp.zeros((n_layers, slab_w, slab_w), jnp.float32)
    for l, (W, b) in enumerate(params):
        in_f, out_f = W.shape
        Wp = Wp.at[l, :in_f, in_f:in_f + out_f].set(W)
        Wp = Wp.at[l, ones_col, in_f:in_f + out_f].set(b)
    return Wp


def dense_nn_forward(x, params, *, max_tb=256):
    """Fused DenseNN forward. x: (B, hn_list[0]) -> (B, hn_list[-1])."""
    B, in0 = x.shape
    n_layers = len(params)
    last_in, last_out = params[-1][0].shape
    total_width = last_in + last_out                     # e.g. 4+32+16+8 = 60
    ones_col = total_width                               # homogeneous-coord column
    slab_w = _round_up(total_width + 1, LANES)           # lane-dense slab width (128)

    Wp = _pack_params(params, slab_w, ones_col)

    # Sublane-aligned batch tile; grow with batch (fewer grid steps, bigger
    # MXU/DMA tiles) but cap so VMEM stays tiny.
    tb = min(_round_up(max(B, 1), SUBLANES), max_tb)
    b_pad = _round_up(B, tb)

    x_slab = jnp.zeros((b_pad, slab_w), jnp.float32)
    x_slab = x_slab.at[:B, :in0].set(x)
    x_slab = x_slab.at[:B, ones_col].set(1.0)            # folds biases into the matmul

    grid = (b_pad // tb,)
    out_slab = pl.pallas_call(
        _dense_nn_kernel,
        out_shape=jax.ShapeDtypeStruct((b_pad, slab_w), jnp.float32),
        grid=grid,
        in_specs=[
            # Activation slab: tiled over batch.
            pl.BlockSpec((tb, slab_w), lambda i: (i, 0)),
            # Packed weights: resident in VMEM across the whole batch grid.
            pl.BlockSpec((n_layers, slab_w, slab_w), lambda i: (0, 0, 0)),
        ],
        out_specs=pl.BlockSpec((tb, slab_w), lambda i: (i, 0)),
        compiler_params=pltpu.CompilerParams(
            dimension_semantics=("parallel",),
        ),
    )(x_slab, Wp)

    # Final layer's output lives at cols [last_in : last_in + last_out).
    return out_slab[:B, last_in:last_in + last_out]


if __name__ == "__main__":
    hn_list = [4, 32, 16, 8]   # layer dims: input=4 -> 32 -> 16 -> 8
    batch = 2

    key = jax.random.PRNGKey(0)
    key, kx = jax.random.split(key)
    x = jax.random.normal(kx, (batch, hn_list[0]), dtype=jnp.float32)

    params = init_dense_nn_params(hn_list, key)

    out = dense_nn_forward(x, params)
    jax.block_until_ready(out)

    # Pure-JAX reference of the dense-connectivity semantics.
    inputs = [x]
    ref = None
    for W, b in params:
        xc = jnp.concatenate(inputs, axis=-1)
        ref = xc @ W + b
        inputs.append(ref)

    assert out.shape == (batch, hn_list[-1])
    assert jnp.allclose(out, ref, atol=1e-5, rtol=1e-5)

    print("KERNEL_OK")
</pallas_src>

<mosaic_0001>
module attributes {stable_mosaic.version = 11 : i64} {
  func.func @_dense_nn_kernel(%arg0: i32, %arg1: memref<8x128xf32, #tpu.memory_space<vmem>>, %arg2: memref<3x128x128xf32, #tpu.memory_space<vmem>>, %arg3: memref<8x128xf32, #tpu.memory_space<vmem>>) attributes {dimension_semantics = [#tpu.dimension_semantics<parallel>], iteration_bounds = array<i64: 1>, scalar_prefetch = 0 : i64, scratch_operands = 0 : i64, tpu.core_type = #tpu.core_type<tc>, window_params = [{transform_indices = @transform_0, window_bounds = array<i64: 8, 128>}, {pipeline_mode = #tpu.pipeline_mode<synchronous>, transform_indices = @transform_1, window_bounds = array<i64: 3, 128, 128>}, {transform_indices = @transform_2, window_bounds = array<i64: 8, 128>}]} {
    %c0 = arith.constant 0 : index
    %c0_0 = arith.constant 0 : index
    %0 = vector.load %arg1[%c0, %c0_0] : memref<8x128xf32, #tpu.memory_space<vmem>>, vector<8x128xf32>
    %c0_1 = arith.constant 0 : index
    %c0_2 = arith.constant 0 : index
    %c0_3 = arith.constant 0 : index
    %1 = vector.load %arg2[%c0_1, %c0_2, %c0_3] : memref<3x128x128xf32, #tpu.memory_space<vmem>>, vector<1x128x128xf32>
    %2 = vector.shape_cast %1 : vector<1x128x128xf32> to vector<128x128xf32>
    %cst = arith.constant dense<0.000000e+00> : vector<8x128xf32>
    %3 = tpu.matmul %0, %2, %cst {dimension_numbers = #tpu.dot_dimension_numbers<[1], [0], [0], [1], [0, 0, 1, 1], [], []>} : vector<8x128xf32>, vector<128x128xf32>, vector<8x128xf32> -> vector<8x128xf32>
    %4 = arith.addf %0, %3 : vector<8x128xf32>
    %c1 = arith.constant 1 : index
    %c0_4 = arith.constant 0 : index
    %c0_5 = arith.constant 0 : index
    %5 = vector.load %arg2[%c1, %c0_4, %c0_5] : memref<3x128x128xf32, #tpu.memory_space<vmem>>, vector<1x128x128xf32>
    %6 = vector.shape_cast %5 : vector<1x128x128xf32> to vector<128x128xf32>
    %cst_6 = arith.constant dense<0.000000e+00> : vector<8x128xf32>
    %7 = tpu.matmul %4, %6, %cst_6 {dimension_numbers = #tpu.dot_dimension_numbers<[1], [0], [0], [1], [0, 0, 1, 1], [], []>} : vector<8x128xf32>, vector<128x128xf32>, vector<8x128xf32> -> vector<8x128xf32>
    %8 = arith.addf %4, %7 : vector<8x128xf32>
    %c2 = arith.constant 2 : index
    %c0_7 = arith.constant 0 : index
    %c0_8 = arith.constant 0 : index
    %9 = vector.load %arg2[%c2, %c0_7, %c0_8] : memref<3x128x128xf32, #tpu.memory_space<vmem>>, vector<1x128x128xf32>
    %10 = vector.shape_cast %9 : vector<1x128x128xf32> to vector<128x128xf32>
    %cst_9 = arith.constant dense<0.000000e+00> : vector<8x128xf32>
    %11 = tpu.matmul %8, %10, %cst_9 {dimension_numbers = #tpu.dot_dimension_numbers<[1], [0], [0], [1], [0, 0, 1, 1], [], []>} : vector<8x128xf32>, vector<128x128xf32>, vector<8x128xf32> -> vector<8x128xf32>
    %12 = arith.addf %8, %11 : vector<8x128xf32>
    %c0_10 = arith.constant 0 : index
    %c0_11 = arith.constant 0 : index
    %13 = vector.load %arg3[%c0_10, %c0_11] : memref<8x128xf32, #tpu.memory_space<vmem>>, vector<8x128xf32>
    tpu.vector_store %arg3[%c0_10, %c0_11], %12 {strides = array<i32>} : memref<8x128xf32, #tpu.memory_space<vmem>>, vector<8x128xf32>,
    return
  }
  func.func @transform_0(%arg0: i32) -> (i32, i32) {
    %c0_i32 = arith.constant 0 : i32
    %c0_i32_0 = arith.constant 0 : i32
    return %arg0, %c0_i32 : i32, i32
  }
  func.func @transform_1(%arg0: i32) -> (i32, i32, i32) {
    %c0_i32 = arith.constant 0 : i32
    %c0_i32_0 = arith.constant 0 : i32
    %c0_i32_1 = arith.constant 0 : i32
    %c0_i32_2 = arith.constant 0 : i32
    return %c0_i32, %c0_i32_0, %c0_i32_1 : i32, i32, i32
  }
  func.func @transform_2(%arg0: i32) -> (i32, i32) {
    %c0_i32 = arith.constant 0 : i32
    %c0_i32_0 = arith.constant 0 : i32
    return %arg0, %c0_i32 : i32, i32
  }
}

</mosaic_0001>

<llo_original>
// kernel: tpu_custom_call.1
$region0: #{tpu_custom_call.1}
  #allocation0 [shape = 'u32[]', space=smem, size = 0x4, offset = 0x4, fixed_abs, tag = 'smem constant byte address 0x4 - core index']
  #allocation1 [shape = 'u32[144,128]{1,0:T(1,128)}', space=vmem, size = 0x12000, scoped, tag = 'internal scratch']
  %s0 = inlined_call_operand.hbm [shape: f32[8,128], index: 0, kind: input, shape index: {}]
  %s1 = inlined_call_operand.hbm [shape: f32[3,128,128], index: 1, kind: input, shape index: {}]
  %s2 = inlined_call_operand.hbm [shape: f32[8,128], index: 2, kind: output, shape index: {}]
  %s3 = sld [smem:[#allocation0]]
  $region26: #{tpu_custom_call.1} parent=0
    _
  %s5 = ssub.s32 1, %s3
  %s6 = scalar_select 0, %s5, %s3
  $region1: #{tpu_custom_call.1} parent=0
    #allocation2 [shape = 'u8[4096]{0}', space=vmem, size = 0x1000, scoped, tag = 'input window, operand 0, single buffered']
    #allocation3 [shape = 's32[1]{0}', space=sflag, size = 0x4, scoped, tag = 'scoped memory for tpu_custom_call.1']
    #allocation4 [shape = 's32[1]{0}', space=sflag, size = 0x4, scoped, tag = 'scoped memory for tpu_custom_call.1']
    #allocation5 [shape = 'u8[196608]{0}', space=vmem, size = 0x30000, scoped, tag = 'input window, operand 1, single buffered']
    #allocation6 [shape = 's32[1]{0}', space=sflag, size = 0x4, scoped, tag = 'scoped memory for tpu_custom_call.1']
    #allocation7 [shape = 'u8[4096]{0}', space=vmem, size = 0x1000, scoped, tag = 'output window, operand 0, single buffered']
    %7 = vsyncpa [#allocation3], 0
    %8 = vsyncpa [#allocation6], 0
    %9 = vsyncpa [#allocation4], 0
    // Predicated region
    $region2: #{tpu_custom_call.1} parent=1 // pred_check
      _
    $region3: #{tpu_custom_call.1} parent=1 // pred_check_branch
      %11 = sbr.rel (0) target = $region5
    $region4: #{tpu_custom_call.1} parent=1 // pred_region
      %s13 = ssub.s32 128, 128
      %14 = vsyncadd [#allocation3], %s13
      %s16 = sshll.u32 [#allocation2], 4
      %s17 = int_to_ptr.vmem [resolvable:$true] %s16
      %19 = dma.hbm_to_vmem [thread:$0]  %s0, 128, %s17, [#allocation3]
    $region5: #{tpu_custom_call.1} parent=1 // pred_fallthru
      _
    // Predicated region
    $region6: #{tpu_custom_call.1} parent=1 // pred_check
      _
    $region7: #{tpu_custom_call.1} parent=1 // pred_check_branch
      %21 = sbr.rel (0) target = $region9
    $region8: #{tpu_custom_call.1} parent=1 // pred_region
      %s23 = ssub.s32 6144, 6144
      %24 = vsyncadd [#allocation6], %s23
      %s25 = sshll.u32 [#allocation5], 4
      %s26 = int_to_ptr.vmem [resolvable:$true] %s25
      %31 = dma.hbm_to_vmem [thread:$0]  %s1, 6144, %s26, [#allocation6], 128, 128, 8
    $region9: #{tpu_custom_call.1} parent=1 // pred_fallthru
      _
    // Predicated region
    $region10: #{tpu_custom_call.1} parent=1 // pred_check
      _
    $region11: #{tpu_custom_call.1} parent=1 // pred_check_branch
      %33 = sbr.rel (0) target = $region13
    $region12: #{tpu_custom_call.1} parent=1 // pred_region
      %34 = dma.done [#allocation3], 128
    $region13: #{tpu_custom_call.1} parent=1 // pred_fallthru
      _
    // Predicated region
    $region14: #{tpu_custom_call.1} parent=1 // pred_check
      _
    $region15: #{tpu_custom_call.1} parent=1 // pred_check_branch
      %36 = sbr.rel (0) target = $region17
    $region16: #{tpu_custom_call.1} parent=1 // pred_region
      %37 = dma.done [#allocation6], 6144
    $region17: #{tpu_custom_call.1} parent=1 // pred_fallthru
      _
    %v38 = vld [vmem:[#allocation2] sm:$0xff]
    %v39 = vld [vmem:[#allocation5] sm:$0xff]
    %v40 = vld [vmem:[#allocation5 + $0x8] sm:$0xff]
    %v41 = vld [vmem:[#allocation5 + $0x10] sm:$0xff]
    %v42 = vld [vmem:[#allocation5 + $0x18] sm:$0xff]
    %v43 = vld [vmem:[#allocation5 + $0x20] sm:$0xff]
    %v44 = vld [vmem:[#allocation5 + $0x28] sm:$0xff]
    %v45 = vld [vmem:[#allocation5 + $0x30] sm:$0xff]
    %v46 = vld [vmem:[#allocation5 + $0x38] sm:$0xff]
    %v47 = vld [vmem:[#allocation5 + $0x40] sm:$0xff]
    %v48 = vld [vmem:[#allocation5 + $0x48] sm:$0xff]
    %v49 = vld [vmem:[#allocation5 + $0x50] sm:$0xff]
    %v50 = vld [vmem:[#allocation5 + $0x58] sm:$0xff]
    %v51 = vld [vmem:[#allocation5 + $0x60] sm:$0xff]
    %v52 = vld [vmem:[#allocation5 + $0x68] sm:$0xff]
    %v53 = vld [vmem:[#allocation5 + $0x70] sm:$0xff]
    %v54 = vld [vmem:[#allocation5 + $0x78] sm:$0xff]
    %55 = vmatprep.subr.mxu0 0.0
    %56 = vmatpush1.msra.mxu0 %v39
    %57 = vmatprep.subr.mxu0 0.0
    %58 = vmatpush1.msra.mxu0 %v40
    %59 = vmatprep.subr.mxu0 0.0
    %60 = vmatpush1.msra.mxu0 %v41
    %61 = vmatprep.subr.mxu0 0.0
    %62 = vmatpush1.msra.mxu0 %v42
    %63 = vmatprep.subr.mxu0 0.0
    %64 = vmatpush1.msra.mxu0 %v43
    %65 = vmatprep.subr.mxu0 0.0
    %66 = vmatpush1.msra.mxu0 %v44
    %67 = vmatprep.subr.mxu0 0.0
    %68 = vmatpush1.msra.mxu0 %v45
    %69 = vmatprep.subr.mxu0 0.0
    %70 = vmatpush1.msra.mxu0 %v46
    %71 = vmatprep.subr.mxu0 0.0
    %72 = vmatpush1.msra.mxu0 %v47
    %73 = vmatprep.subr.mxu0 0.0
    %74 = vmatpush1.msra.mxu0 %v48
    %75 = vmatprep.subr.mxu0 0.0
    %76 = vmatpush1.msra.mxu0 %v49
    %77 = vmatprep.subr.mxu0 0.0
    %78 = vmatpush1.msra.mxu0 %v50
    %79 = vmatprep.subr.mxu0 0.0
    %80 = vmatpush1.msra.mxu0 %v51
    %81 = vmatprep.subr.mxu0 0.0
    %82 = vmatpush1.msra.mxu0 %v52
    %83 = vmatprep.subr.mxu0 0.0
    %84 = vmatpush1.msra.mxu0 %v53
    %85 = vmatprep.subr.mxu0 0.0
    %86 = vmatpush1.msra.mxu0 %v54
    %87 = vmatprep.subr.mxu0 0.0
    %88 = vmatpush1.msra.mxu0 0.0
    %89 = vmatprep.subr.mxu0 0.0
    %90 = vmatpush1.msra.mxu0 0.0
    %91 = vmatprep.subr.mxu0 0.0
    %92 = vmatpush1.msra.mxu0 0.0
    %93 = vmatprep.subr.mxu0 0.0
    %94 = vmatpush1.msra.mxu0 0.0
    %95 = vmatprep.subr.mxu0 0.0
    %96 = vmatpush1.msra.mxu0 0.0
    %97 = vmatprep.subr.mxu0 0.0
    %98 = vmatpush1.msra.mxu0 0.0
    %99 = vmatprep.subr.mxu0 0.0
    %100 = vmatpush1.msra.mxu0 0.0
    %101 = vmatprep.subr.mxu0 0.0
    %102 = vmatpush1.msra.mxu0 0.0
    %103 = vmatprep.subr.mxu0 0.0
    %104 = vmatpush1.msra.mxu0 0.0
    %105 = vmatprep.subr.mxu0 0.0
    %106 = vmatpush1.msra.mxu0 0.0
    %107 = vmatprep.subr.mxu0 0.0
    %108 = vmatpush1.msra.mxu0 0.0
    %109 = vmatprep.subr.mxu0 0.0
    %110 = vmatpush1.msra.mxu0 0.0
    %111 = vmatprep.subr.mxu0 0.0
    %112 = vmatpush1.msra.mxu0 0.0
    %113 = vmatprep.subr.mxu0 0.0
    %114 = vmatpush1.msra.mxu0 0.0
    %115 = vmatprep.subr.mxu0 0.0
    %116 = vmatpush1.msra.mxu0 0.0
    %117 = vmatprep.subr.mxu0 0.0
    %118 = vmatpush1.msra.mxu0 0.0
    %119 = vmatprep.mubr.f32.mxu0 0.0
    %120 = vmatmul.mubr.f32.gmra.mrb[0].mxu0 %v38
    %v121 = vpop.f32.mrb[0].mxu0
    %v122 = vadd.f32 0.0, %v121
    %v123 = vpop.f32.mrb[0].mxu0
    %124 = vdwg.mxu0
    %v125 = vadd.f32 %v38, %v122
    %s126 = scalar_lea.vmem [#allocation5], 128
    %v127 = vld [vmem:[%s126] sm:$0xff]
    %v128 = vld [vmem:[%s126 + $0x8] sm:$0xff]
    %v129 = vld [vmem:[%s126 + $0x10] sm:$0xff]
    %v130 = vld [vmem:[%s126 + $0x18] sm:$0xff]
    %v131 = vld [vmem:[%s126 + $0x20] sm:$0xff]
    %v132 = vld [vmem:[%s126 + $0x28] sm:$0xff]
    %v133 = vld [vmem:[%s126 + $0x30] sm:$0xff]
    %v134 = vld [vmem:[%s126 + $0x38] sm:$0xff]
    %v135 = vld [vmem:[%s126 + $0x40] sm:$0xff]
    %v136 = vld [vmem:[%s126 + $0x48] sm:$0xff]
    %v137 = vld [vmem:[%s126 + $0x50] sm:$0xff]
    %v138 = vld [vmem:[%s126 + $0x58] sm:$0xff]
    %v139 = vld [vmem:[%s126 + $0x60] sm:$0xff]
    %v140 = vld [vmem:[%s126 + $0x68] sm:$0xff]
    %v141 = vld [vmem:[%s126 + $0x70] sm:$0xff]
    %v142 = vld [vmem:[%s126 + $0x78] sm:$0xff]
    %143 = vmatprep.subr.mxu0 0.0
    %144 = vmatpush1.msra.mxu0 %v127
    %145 = vmatprep.subr.mxu0 0.0
    %146 = vmatpush1.msra.mxu0 %v128
    %147 = vmatprep.subr.mxu0 0.0
    %148 = vmatpush1.msra.mxu0 %v129
    %149 = vmatprep.subr.mxu0 0.0
    %150 = vmatpush1.msra.mxu0 %v130
    %151 = vmatprep.subr.mxu0 0.0
    %152 = vmatpush1.msra.mxu0 %v131
    %153 = vmatprep.subr.mxu0 0.0
    %154 = vmatpush1.msra.mxu0 %v132
    %155 = vmatprep.subr.mxu0 0.0
    %156 = vmatpush1.msra.mxu0 %v133
    %157 = vmatprep.subr.mxu0 0.0
    %158 = vmatpush1.msra.mxu0 %v134
    %159 = vmatprep.subr.mxu0 0.0
    %160 = vmatpush1.msra.mxu0 %v135
    %161 = vmatprep.subr.mxu0 0.0
    %162 = vmatpush1.msra.mxu0 %v136
    %163 = vmatprep.subr.mxu0 0.0
    %164 = vmatpush1.msra.mxu0 %v137
    %165 = vmatprep.subr.mxu0 0.0
    %166 = vmatpush1.msra.mxu0 %v138
    %167 = vmatprep.subr.mxu0 0.0
    %168 = vmatpush1.msra.mxu0 %v139
    %169 = vmatprep.subr.mxu0 0.0
    %170 = vmatpush1.msra.mxu0 %v140
    %171 = vmatprep.subr.mxu0 0.0
    %172 = vmatpush1.msra.mxu0 %v141
    %173 = vmatprep.subr.mxu0 0.0
    %174 = vmatpush1.msra.mxu0 %v142
    %175 = vmatprep.subr.mxu0 0.0
    %176 = vmatpush1.msra.mxu0 0.0
    %177 = vmatprep.subr.mxu0 0.0
    %178 = vmatpush1.msra.mxu0 0.0
    %179 = vmatprep.subr.mxu0 0.0
    %180 = vmatpush1.msra.mxu0 0.0
    %181 = vmatprep.subr.mxu0 0.0
    %182 = vmatpush1.msra.mxu0 0.0
    %183 = vmatprep.subr.mxu0 0.0
    %184 = vmatpush1.msra.mxu0 0.0
    %185 = vmatprep.subr.mxu0 0.0
    %186 = vmatpush1.msra.mxu0 0.0
    %187 = vmatprep.subr.mxu0 0.0
    %188 = vmatpush1.msra.mxu0 0.0
    %189 = vmatprep.subr.mxu0 0.0
    %190 = vmatpush1.msra.mxu0 0.0
    %191 = vmatprep.subr.mxu0 0.0
    %192 = vmatpush1.msra.mxu0 0.0
    %193 = vmatprep.subr.mxu0 0.0
    %194 = vmatpush1.msra.mxu0 0.0
    %195 = vmatprep.subr.mxu0 0.0
    %196 = vmatpush1.msra.mxu0 0.0
    %197 = vmatprep.subr.mxu0 0.0
    %198 = vmatpush1.msra.mxu0 0.0
    %199 = vmatprep.subr.mxu0 0.0
    %200 = vmatpush1.msra.mxu0 0.0
    %201 = vmatprep.subr.mxu0 0.0
    %202 = vmatpush1.msra.mxu0 0.0
    %203 = vmatprep.subr.mxu0 0.0
    %204 = vmatpush1.msra.mxu0 0.0
    %205 = vmatprep.subr.mxu0 0.0
    %206 = vmatpush1.msra.mxu0 0.0
    %207 = vmatprep.mubr.f32.mxu0 0.0
    %208 = vmatmul.mubr.f32.gmra.mrb[0].mxu0 %v125
    %v209 = vpop.f32.mrb[0].mxu0
    %v210 = vadd.f32 0.0, %v209
    %v211 = vpop.f32.mrb[0].mxu0
    %212 = vdwg.mxu0
    %v213 = vadd.f32 %v125, %v210
    %s214 = scalar_lea.vmem [#allocation5], 256
    %v215 = vld [vmem:[%s214] sm:$0xff]
    %v216 = vld [vmem:[%s214 + $0x8] sm:$0xff]
    %v217 = vld [vmem:[%s214 + $0x10] sm:$0xff]
    %v218 = vld [vmem:[%s214 + $0x18] sm:$0xff]
    %v219 = vld [vmem:[%s214 + $0x20] sm:$0xff]
    %v220 = vld [vmem:[%s214 + $0x28] sm:$0xff]
    %v221 = vld [vmem:[%s214 + $0x30] sm:$0xff]
    %v222 = vld [vmem:[%s214 + $0x38] sm:$0xff]
    %v223 = vld [vmem:[%s214 + $0x40] sm:$0xff]
    %v224 = vld [vmem:[%s214 + $0x48] sm:$0xff]
    %v225 = vld [vmem:[%s214 + $0x50] sm:$0xff]
    %v226 = vld [vmem:[%s214 + $0x58] sm:$0xff]
    %v227 = vld [vmem:[%s214 + $0x60] sm:$0xff]
    %v228 = vld [vmem:[%s214 + $0x68] sm:$0xff]
    %v229 = vld [vmem:[%s214 + $0x70] sm:$0xff]
    %v230 = vld [vmem:[%s214 + $0x78] sm:$0xff]
    %231 = vmatprep.subr.mxu0 0.0
    %232 = vmatpush1.msra.mxu0 %v215
    %233 = vmatprep.subr.mxu0 0.0
    %234 = vmatpush1.msra.mxu0 %v216
    %235 = vmatprep.subr.mxu0 0.0
    %236 = vmatpush1.msra.mxu0 %v217
    %237 = vmatprep.subr.mxu0 0.0
    %238 = vmatpush1.msra.mxu0 %v218
    %239 = vmatprep.subr.mxu0 0.0
    %240 = vmatpush1.msra.mxu0 %v219
    %241 = vmatprep.subr.mxu0 0.0
    %242 = vmatpush1.msra.mxu0 %v220
    %243 = vmatprep.subr.mxu0 0.0
    %244 = vmatpush1.msra.mxu0 %v221
    %245 = vmatprep.subr.mxu0 0.0
    %246 = vmatpush1.msra.mxu0 %v222
    %247 = vmatprep.subr.mxu0 0.0
    %248 = vmatpush1.msra.mxu0 %v223
    %249 = vmatprep.subr.mxu0 0.0
    %250 = vmatpush1.msra.mxu0 %v224
    %251 = vmatprep.subr.mxu0 0.0
    %252 = vmatpush1.msra.mxu0 %v225
    %253 = vmatprep.subr.mxu0 0.0
    %254 = vmatpush1.msra.mxu0 %v226
    %255 = vmatprep.subr.mxu0 0.0
    %256 = vmatpush1.msra.mxu0 %v227
    %257 = vmatprep.subr.mxu0 0.0
    %258 = vmatpush1.msra.mxu0 %v228
    %259 = vmatprep.subr.mxu0 0.0
    %260 = vmatpush1.msra.mxu0 %v229
    %261 = vmatprep.subr.mxu0 0.0
    %262 = vmatpush1.msra.mxu0 %v230
    %263 = vmatprep.subr.mxu0 0.0
    %264 = vmatpush1.msra.mxu0 0.0
    %265 = vmatprep.subr.mxu0 0.0
    %266 = vmatpush1.msra.mxu0 0.0
    %267 = vmatprep.subr.mxu0 0.0
    %268 = vmatpush1.msra.mxu0 0.0
    %269 = vmatprep.subr.mxu0 0.0
    %270 = vmatpush1.msra.mxu0 0.0
    %271 = vmatprep.subr.mxu0 0.0
    %272 = vmatpush1.msra.mxu0 0.0
    %273 = vmatprep.subr.mxu0 0.0
    %274 = vmatpush1.msra.mxu0 0.0
    %275 = vmatprep.subr.mxu0 0.0
    %276 = vmatpush1.msra.mxu0 0.0
    %277 = vmatprep.subr.mxu0 0.0
    %278 = vmatpush1.msra.mxu0 0.0
    %279 = vmatprep.subr.mxu0 0.0
    %280 = vmatpush1.msra.mxu0 0.0
    %281 = vmatprep.subr.mxu0 0.0
    %282 = vmatpush1.msra.mxu0 0.0
    %283 = vmatprep.subr.mxu0 0.0
    %284 = vmatpush1.msra.mxu0 0.0
    %285 = vmatprep.subr.mxu0 0.0
    %286 = vmatpush1.msra.mxu0 0.0
    %287 = vmatprep.subr.mxu0 0.0
    %288 = vmatpush1.msra.mxu0 0.0
    %289 = vmatprep.subr.mxu0 0.0
    %290 = vmatpush1.msra.mxu0 0.0
    %291 = vmatprep.subr.mxu0 0.0
    %292 = vmatpush1.msra.mxu0 0.0
    %293 = vmatprep.subr.mxu0 0.0
    %294 = vmatpush1.msra.mxu0 0.0
    %295 = vmatprep.mubr.f32.mxu0 0.0
    %296 = vmatmul.mubr.f32.gmra.mrb[0].mxu0 %v213
    %v297 = vpop.f32.mrb[0].mxu0
    %v298 = vadd.f32 0.0, %v297
    %v299 = vpop.f32.mrb[0].mxu0
    %300 = vdwg.mxu0
    %v301 = vadd.f32 %v213, %v298
    %302 = vst [vmem:[#allocation7] sm:$0xff] %v301
    // Predicated region
    $region18: #{tpu_custom_call.1} parent=1 // pred_check
      _
    $region19: #{tpu_custom_call.1} parent=1 // pred_check_branch
      %304 = sbr.rel (0) target = $region21
    $region20: #{tpu_custom_call.1} parent=1 // pred_region
      %s306 = ssub.s32 128, 128
      %307 = vsyncadd [#allocation4], %s306
      %s309 = sshll.u32 [#allocation7], 4
      %s310 = int_to_ptr.vmem [resolvable:$true] %s309
      %312 = dma.vmem_to_hbm [thread:$0]  %s310, 128, %s2, [#allocation4]
    $region21: #{tpu_custom_call.1} parent=1 // pred_fallthru
      _
    // Predicated region
    $region22: #{tpu_custom_call.1} parent=1 // pred_check
      _
    $region23: #{tpu_custom_call.1} parent=1 // pred_check_branch
      %314 = sbr.rel (0) target = $region25
    $region24: #{tpu_custom_call.1} parent=1 // pred_region
      %315 = dma.done [#allocation4], 128
    $region25: #{tpu_custom_call.1} parent=1 // pred_fallthru
      _
    %316 = vsyncpa [#allocation3], 1
    %317 = vsyncpa [#allocation6], 1
    %318 = vsyncpa [#allocation4], 1

</llo_original>
